<compile_context>
chip_gen: v7x
topology: tpu7x:2x2x1
jax: 0.10.0
libtpu: 0.0.40
codegen_flags: <defaults>
</compile_context>

<pallas_src>
import jax
import jax.numpy as jnp
from jax.experimental import pallas as pl
from jax.experimental.pallas import tpu as pltpu

_LANES = 128
_SUBLANES = 8


def logistic_kernel(x_ref, wb_ref, o_ref):
    # x_ref / o_ref: (TR, 128) VMEM tiles; wb_ref: (2,) SMEM = [weight, bias].
    w = wb_ref[0]
    b = wb_ref[1]
    z = x_ref[...] * w + b                      # nn.Linear(1, 1): x * w + b
    # sigmoid(z) = 0.5 * tanh(0.5 * z) + 0.5 — one EUP transcendental per elem.
    o_ref[...] = 0.5 * jnp.tanh(0.5 * z) + 0.5


def logistic_forward(x, weight, bias, *, tile_rows=8192):
    """x: (B, 1) f32; weight: (1, 1) f32; bias: (1,) f32 -> (B, 1) f32."""
    B = x.shape[0]

    # Pack weight & bias into a single (2,) f32 SMEM array (one DMA descriptor).
    wb = jnp.concatenate([weight.reshape(-1), bias.reshape(-1)]).astype(jnp.float32)

    # --- lane-dense layout: (B, 1) -> (rows, 128) slab ------------------------
    flat = x.astype(jnp.float32).reshape(-1)          # in_features == 1
    rows = pl.cdiv(B, _LANES)

    if rows < _SUBLANES:
        # Tiny batch: one (8, 128) tile; the pad cost is negligible here.
        rows_padded, tr = _SUBLANES, _SUBLANES
    else:
        rows_padded = rows                            # no row padding; Pallas masks
                                                      # the partial tail block
        # Cap tr so (a) the grid has >= 2 steps once there are >= 2 (8,128)
        # tiles of work (megacore sharding on v7x) and (b) each block stays at
        # <= tile_rows rows (4 MiB) for safe double-buffered VMEM usage.
        half = max(_SUBLANES, (rows // 2) // _SUBLANES * _SUBLANES)
        tr = min(tile_rows, half)

    total = rows_padded * _LANES
    if total == B:
        slab = flat.reshape(rows_padded, _LANES)      # free reshape, no pad pass
    else:
        slab = jnp.pad(flat, (0, total - B)).reshape(rows_padded, _LANES)

    grid = (pl.cdiv(rows_padded, tr),)
    n = rows_padded * _LANES

    out_slab = pl.pallas_call(
        logistic_kernel,
        out_shape=jax.ShapeDtypeStruct((rows_padded, _LANES), jnp.float32),
        grid_spec=pltpu.PrefetchScalarGridSpec(
            num_scalar_prefetch=0,
            grid=grid,
            in_specs=[
                pl.BlockSpec((tr, _LANES), lambda i: (i, 0)),   # x slab tile
                pl.BlockSpec(memory_space=pltpu.SMEM),          # [w, b] scalars
            ],
            out_specs=pl.BlockSpec((tr, _LANES), lambda i: (i, 0)),
        ),
        compiler_params=pltpu.CompilerParams(
            dimension_semantics=("parallel",),        # v7x: shard batch over 2 TCs
            vmem_limit_bytes=32 << 20,                # headroom for 4 x 4 MiB buffers
        ),
        cost_estimate=pl.CostEstimate(
            flops=5 * n, transcendentals=n, bytes_accessed=8 * n),
    )(slab, wb)

    if total == B:
        return out_slab.reshape(B, 1)                 # no trailing slice pass
    # A lane pad existed (B % 128 != 0): trim it and restore (B, 1).
    return out_slab.reshape(-1)[:B].reshape(B, 1)


if __name__ == "__main__":
    key = jax.random.PRNGKey(0)
    kx, kw, kb = jax.random.split(key, 3)

    B = 8
    x = jax.random.normal(kx, (B, 1), dtype=jnp.float32)

    # Deterministic init mimicking nn.Linear(1, 1): U(-1, 1) since fan_in = 1.
    weight = jax.random.uniform(kw, (1, 1), minval=-1.0, maxval=1.0, dtype=jnp.float32)
    bias = jax.random.uniform(kb, (1,), minval=-1.0, maxval=1.0, dtype=jnp.float32)

    out = logistic_forward(x, weight, bias)
    jax.block_until_ready(out)

    # Reference check in plain JAX.
    ref = jax.nn.sigmoid(x @ weight.T + bias)
    assert out.shape == (B, 1)
    assert jnp.allclose(out, ref, atol=1e-6), (out, ref)

    print("KERNEL_OK")
</pallas_src>

<mosaic_0001>
module attributes {stable_mosaic.version = 11 : i64} {
  func.func @logistic_kernel(%arg0: i32, %arg1: memref<8x128xf32, #tpu.memory_space<vmem>>, %arg2: memref<2xf32, #tpu.memory_space<smem>>, %arg3: memref<8x128xf32, #tpu.memory_space<vmem>>) attributes {dimension_semantics = [#tpu.dimension_semantics<parallel>], iteration_bounds = array<i64: 1>, scalar_prefetch = 0 : i64, scratch_operands = 0 : i64, tpu.core_type = #tpu.core_type<tc>, window_params = [{transform_indices = @transform_0, window_bounds = array<i64: 8, 128>}, {transform_indices = @transform_1, window_bounds = array<i64: 2>}, {transform_indices = @transform_2, window_bounds = array<i64: 8, 128>}]} {
    %c0 = arith.constant 0 : index
    %0 = memref.load %arg2[%c0] : memref<2xf32, #tpu.memory_space<smem>>
    %c1 = arith.constant 1 : index
    %1 = memref.load %arg2[%c1] : memref<2xf32, #tpu.memory_space<smem>>
    %c0_0 = arith.constant 0 : index
    %c0_1 = arith.constant 0 : index
    %2 = vector.load %arg1[%c0_0, %c0_1] : memref<8x128xf32, #tpu.memory_space<vmem>>, vector<8x128xf32>
    %3 = vector.broadcast %0 : f32 to vector<8x128xf32>
    %4 = arith.mulf %2, %3 : vector<8x128xf32>
    %5 = vector.broadcast %1 : f32 to vector<8x128xf32>
    %6 = arith.addf %4, %5 : vector<8x128xf32>
    %cst = arith.constant 5.000000e-01 : f32
    %7 = vector.broadcast %cst : f32 to vector<8x128xf32>
    %8 = arith.mulf %7, %6 : vector<8x128xf32>
    %9 = math.tanh %8 : vector<8x128xf32>
    %cst_2 = arith.constant 5.000000e-01 : f32
    %10 = vector.broadcast %cst_2 : f32 to vector<8x128xf32>
    %11 = arith.mulf %10, %9 : vector<8x128xf32>
    %cst_3 = arith.constant 5.000000e-01 : f32
    %12 = vector.broadcast %cst_3 : f32 to vector<8x128xf32>
    %13 = arith.addf %11, %12 : vector<8x128xf32>
    %c0_4 = arith.constant 0 : index
    %c0_5 = arith.constant 0 : index
    %14 = vector.load %arg3[%c0_4, %c0_5] : memref<8x128xf32, #tpu.memory_space<vmem>>, vector<8x128xf32>
    tpu.vector_store %arg3[%c0_4, %c0_5], %13 {strides = array<i32>} : memref<8x128xf32, #tpu.memory_space<vmem>>, vector<8x128xf32>,
    return
  }
  func.func @transform_0(%arg0: i32) -> (i32, i32) {
    %c0_i32 = arith.constant 0 : i32
    %c0_i32_0 = arith.constant 0 : i32
    return %arg0, %c0_i32 : i32, i32
  }
  func.func @transform_1(%arg0: i32) -> i32 {
    %c0_i32 = arith.constant 0 : i32
    %c0_i32_0 = arith.constant 0 : i32
    return %c0_i32 : i32
  }
  func.func @transform_2(%arg0: i32) -> (i32, i32) {
    %c0_i32 = arith.constant 0 : i32
    %c0_i32_0 = arith.constant 0 : i32
    return %arg0, %c0_i32 : i32, i32
  }
}

</mosaic_0001>

<llo_original>
// kernel: tpu_custom_call.1
$region0: #{tpu_custom_call.1}
  #allocation0 [shape = 'u32[]', space=smem, size = 0x4, offset = 0x4, fixed_abs, tag = 'smem constant byte address 0x4 - core index']
  #allocation1 [shape = 'u32[144,128]{1,0:T(1,128)}', space=vmem, size = 0x12000, scoped, tag = 'internal scratch']
  %s0 = inlined_call_operand.hbm [shape: f32[8,128], index: 0, kind: input, shape index: {}]
  %s1 = inlined_call_operand.vmem [shape: f32[2], index: 1, kind: input, shape index: {}]
  %s2 = inlined_call_operand.hbm [shape: f32[8,128], index: 2, kind: output, shape index: {}]
  %s3 = sld [smem:[#allocation0]]
  $region26: #{tpu_custom_call.1} parent=0
    _
  %s5 = ssub.s32 1, %s3
  %s6 = scalar_select 0, %s5, %s3
  $region1: #{tpu_custom_call.1} parent=0
    #allocation2 [shape = 'u8[4096]{0}', space=vmem, size = 0x1000, scoped, tag = 'input window, operand 0, single buffered']
    #allocation3 [shape = 's32[1]{0}', space=sflag, size = 0x4, scoped, tag = 'scoped memory for tpu_custom_call.1']
    #allocation4 [shape = 's32[1]{0}', space=sflag, size = 0x4, scoped, tag = 'scoped memory for tpu_custom_call.1']
    #allocation5 [shape = 's32[1]{0}', space=sflag, size = 0x4, scoped, tag = 'scoped memory for tpu_custom_call.1']
    #allocation6 [shape = 'u8[512]{0}', space=smem, size = 0x200, scoped, tag = 'input window, operand 1, single buffered']
    #allocation7 [shape = 'u8[4096]{0}', space=vmem, size = 0x1000, scoped, tag = 'output window, operand 0, single buffered']
    %7 = vsyncpa [#allocation3], 0
    %8 = vsyncpa [#allocation5], 0
    %9 = vsyncpa [#allocation4], 0
    // Predicated region
    $region2: #{tpu_custom_call.1} parent=1 // pred_check
      _
    $region3: #{tpu_custom_call.1} parent=1 // pred_check_branch
      %11 = sbr.rel (0) target = $region5
    $region4: #{tpu_custom_call.1} parent=1 // pred_region
      %s13 = ssub.s32 128, 128
      %14 = vsyncadd [#allocation3], %s13
      %s16 = sshll.u32 [#allocation2], 4
      %s17 = int_to_ptr.vmem [resolvable:$true] %s16
      %19 = dma.hbm_to_vmem [thread:$0]  %s0, 128, %s17, [#allocation3]
    $region5: #{tpu_custom_call.1} parent=1 // pred_fallthru
      _
    // Predicated region
    $region6: #{tpu_custom_call.1} parent=1 // pred_check
      _
    $region7: #{tpu_custom_call.1} parent=1 // pred_check_branch
      %21 = sbr.rel (0) target = $region9
    $region8: #{tpu_custom_call.1} parent=1 // pred_region
      %s23 = ssub.s32 16, 16
      %24 = vsyncadd [#allocation5], %s23
      %s26 = sshll.u32 %s1, 4
      %s27 = int_to_ptr.vmem [resolvable:$true] %s26
      %29 = dma.vmem_to_smem %s27, 16, [#allocation6], [#allocation5]
    $region9: #{tpu_custom_call.1} parent=1 // pred_fallthru
      _
    // Predicated region
    $region10: #{tpu_custom_call.1} parent=1 // pred_check
      _
    $region11: #{tpu_custom_call.1} parent=1 // pred_check_branch
      %31 = sbr.rel (0) target = $region13
    $region12: #{tpu_custom_call.1} parent=1 // pred_region
      %32 = dma.done [#allocation3], 128
    $region13: #{tpu_custom_call.1} parent=1 // pred_fallthru
      _
    // Predicated region
    $region14: #{tpu_custom_call.1} parent=1 // pred_check
      _
    $region15: #{tpu_custom_call.1} parent=1 // pred_check_branch
      %34 = sbr.rel (0) target = $region17
    $region16: #{tpu_custom_call.1} parent=1 // pred_region
      %35 = dma.done [#allocation5], 16
    $region17: #{tpu_custom_call.1} parent=1 // pred_fallthru
      _
    %36 = sfence
    %s37 = sld [smem:[#allocation6]]
    %s38 = sld [smem:[#allocation6 + $0x1]]
    %v39 = vld [vmem:[#allocation2] sm:$0xff]
    %v40 = vstv %s37
    %v41 = vmul.f32 %v39, %v40
    %v42 = vstv %s38
    %v43 = vadd.f32 %v41, %v42
    %v44 = vmul.f32 %v43, 0.5
    %v45 = vtanh.pop %v44
    %v46 = vmul.f32 %v45, 0.5
    %v47 = vadd.f32 %v46, 0.5
    %48 = vst [vmem:[#allocation7] sm:$0xff] %v47
    // Predicated region
    $region18: #{tpu_custom_call.1} parent=1 // pred_check
      _
    $region19: #{tpu_custom_call.1} parent=1 // pred_check_branch
      %50 = sbr.rel (0) target = $region21
    $region20: #{tpu_custom_call.1} parent=1 // pred_region
      %s52 = ssub.s32 128, 128
      %53 = vsyncadd [#allocation4], %s52
      %s55 = sshll.u32 [#allocation7], 4
      %s56 = int_to_ptr.vmem [resolvable:$true] %s55
      %58 = dma.vmem_to_hbm [thread:$0]  %s56, 128, %s2, [#allocation4]
    $region21: #{tpu_custom_call.1} parent=1 // pred_fallthru
      _
    // Predicated region
    $region22: #{tpu_custom_call.1} parent=1 // pred_check
      _
    $region23: #{tpu_custom_call.1} parent=1 // pred_check_branch
      %60 = sbr.rel (0) target = $region25
    $region24: #{tpu_custom_call.1} parent=1 // pred_region
      %61 = dma.done [#allocation4], 128
    $region25: #{tpu_custom_call.1} parent=1 // pred_fallthru
      _
    %62 = vsyncpa [#allocation3], 1
    %63 = vsyncpa [#allocation4], 1
    %64 = vsyncpa [#allocation5], 1

</llo_original>
